<compile_context>
chip_gen: v6e
topology: v6e:2x2x1
jax: 0.10.0
libtpu: 0.0.40
codegen_flags: <defaults>
</compile_context>

<pallas_src>
import functools

import jax
import jax.numpy as jnp
from jax import lax
from jax.experimental import pallas as pl
from jax.experimental.pallas import tpu as pltpu


def _round_up(n, m):
    return ((n + m - 1) // m) * m


def _deep_kernel(x_ref, w1_ref, b1_ref, w2_ref, b2_ref, w3_ref, b3_ref,
                 w4_ref, b4_ref, o_ref):
    """One batch tile of sigmoid(relu(relu(relu(x@W1+b1)@W2+b2)@W3+b3)@W4+b4)."""
    cdt = w1_ref.dtype   # MXU operand dtype (bf16 fast path or f32)
    edt = b1_ref.dtype   # bias-add / ReLU (epilogue) dtype for layers 1-2

    # Cast the x tile in-kernel: no host-side full-HBM pad/cast pass.
    x = x_ref[...].astype(cdt)                                        # (TB, D)

    # Layers 1-2: MXU with f32 accumulation; epilogue (cast -> +bias -> ReLU)
    # runs in `edt` (bf16 on v6e/v7x packs 2x elements per vreg).
    h1 = jnp.dot(x, w1_ref[...], preferred_element_type=jnp.float32)
    h1 = jnp.maximum(h1.astype(edt) + b1_ref[...], 0.0)               # (TB, 256)

    h2 = jnp.dot(h1.astype(cdt), w2_ref[...],
                 preferred_element_type=jnp.float32)
    h2 = jnp.maximum(h2.astype(edt) + b2_ref[...], 0.0)               # (TB, 128)

    # Layer 3 epilogue stays in f32: it feeds the f32 final layer directly.
    h3 = jnp.dot(h2.astype(cdt), w3_ref[...],
                 preferred_element_type=jnp.float32)
    h3 = jnp.maximum(h3 + b3_ref[...], 0.0)                           # (TB, 64) f32

    # Final 64 -> 1 layer, kept in f32.  w4_ref is W4^T zero-padded to (8, 64)
    # (row 0 holds the real weights).  Contracting both 64-wide axes ("NT"
    # form) gives a lane-dense (8, TB) result; summing the 8 sublanes (rows
    # 1..7 are exactly zero) yields the (1, TB) output row -> unmasked stores.
    rows = lax.dot_general(w4_ref[...], h3,
                           dimension_numbers=(((1,), (1,)), ((), ())),
                           preferred_element_type=jnp.float32)        # (8, TB)
    row = jnp.sum(rows, axis=0, keepdims=True) + b4_ref[...]          # (1, TB)

    o_ref[...] = jax.nn.sigmoid(row).astype(o_ref.dtype)


@functools.partial(jax.jit,
                   static_argnames=("tb", "compute_dtype", "epilogue_dtype"))
def deep_forward(x, params, *, tb=4096, compute_dtype=jnp.bfloat16,
                 epilogue_dtype=None):
    """x: (B, nb_nodes). params: W1..W4 in (in, out) layout, b1..b4 as (1, out).

    tb:             requested batch tile (rounded to a multiple of 256).
    compute_dtype:  MXU operand dtype for layers 1-3 (bf16 default; f32 for
                    strict accuracy).  Accumulation, the final layer and the
                    sigmoid are always f32.
    epilogue_dtype: bias-add/ReLU dtype for layers 1-2 (defaults to
                    compute_dtype; pass jnp.float32 on v5e, which has no bf16
                    VALU).
    """
    B, D = x.shape
    cdt = jnp.dtype(compute_dtype)
    edt = jnp.dtype(epilogue_dtype) if epilogue_dtype is not None else cdt

    # ---- Batch tile selection ------------------------------------------
    tbe = _round_up(max(tb, 256), 256)
    # Guarantee >= 2 grid steps once B > 256 so the "parallel" batch axis can
    # split across v7x's two TensorCores (one extra ~0.35us step elsewhere).
    tbe = min(tbe, _round_up(-(-B // 2), 256))
    if tbe >= B:
        tbe = B            # single full block; block == array dim is always legal
    n_tiles = -(-B // tbe)  # cdiv; tail block (if any) is partial

    # ---- Host-side operand prep (weights only; x is passed through as-is) ---
    w1 = params["W1"].astype(cdt)                         # (D, 256)
    w2 = params["W2"].astype(cdt)                         # (256, 128)
    w3 = params["W3"].astype(cdt)                         # (128, 64)
    b1 = params["b1"].astype(edt)                         # (1, 256)
    b2 = params["b2"].astype(edt)                         # (1, 128)
    b3 = params["b3"].astype(jnp.float32)                 # (1, 64) f32 epilogue
    # Final layer kept in f32: W4^T padded to 8 sublanes (rows 1..7 zero).
    w4t8 = jnp.zeros((8, 64), jnp.float32).at[0, :].set(
        params["W4"][:, 0].astype(jnp.float32))
    b4 = params["b4"].astype(jnp.float32).reshape(1, 1)

    full = lambda a: pl.BlockSpec(a.shape, lambda i: (0,) * a.ndim)

    flops = 2 * B * (D * 256 + 256 * 128 + 128 * 64 + 8 * 64)
    bytes_accessed = (
        x.size * x.dtype.itemsize
        + sum(a.size * a.dtype.itemsize
              for a in (w1, b1, w2, b2, w3, b3, w4t8, b4))
        + B * 4)

    out = pl.pallas_call(
        _deep_kernel,
        out_shape=jax.ShapeDtypeStruct((1, B), jnp.float32),
        grid_spec=pltpu.PrefetchScalarGridSpec(
            num_scalar_prefetch=0,
            grid=(n_tiles,),
            in_specs=[
                pl.BlockSpec((tbe, D), lambda i: (i, 0)),   # x tile (unpadded)
                full(w1), full(b1),
                full(w2), full(b2),
                full(w3), full(b3),
                full(w4t8), full(b4),
            ],
            # Lane-dense output: one (1, tbe) row per grid step.
            out_specs=pl.BlockSpec((1, tbe), lambda i: (0, i)),
        ),
        compiler_params=pltpu.CompilerParams(
            dimension_semantics=("parallel",),
            # Headroom for TB=4096 f32 activation temporaries on v5e's 16 MiB
            # scoped-VMEM default; well under physical VMEM everywhere.
            vmem_limit_bytes=32 * 1024 * 1024),
        cost_estimate=pl.CostEstimate(
            flops=flops, transcendentals=B, bytes_accessed=bytes_accessed),
    )(x, w1, b1, w2, b2, w3, b3, w4t8, b4)

    # (1, B) row-major == per-batch-row order; back to (B, 1).
    return out.reshape(B, 1)


def init_params(nb_nodes, key):
    """Deterministic init mimicking nn.Linear (uniform(-1/sqrt(fan_in), ...))."""
    dims = [(nb_nodes, 256), (256, 128), (128, 64), (64, 1)]
    params = {}
    keys = jax.random.split(key, 2 * len(dims))
    for idx, (fan_in, fan_out) in enumerate(dims):
        bound = 1.0 / jnp.sqrt(fan_in)
        w = jax.random.uniform(keys[2 * idx], (fan_in, fan_out),
                               minval=-bound, maxval=bound, dtype=jnp.float32)
        b = jax.random.uniform(keys[2 * idx + 1], (1, fan_out),
                               minval=-bound, maxval=bound, dtype=jnp.float32)
        params[f"W{idx + 1}"] = w
        params[f"b{idx + 1}"] = b
    return params


def deep_forward_ref(x, params):
    """Pure-JAX reference for correctness checking."""
    h = jnp.maximum(x @ params["W1"] + params["b1"], 0.0)
    h = jnp.maximum(h @ params["W2"] + params["b2"], 0.0)
    h = jnp.maximum(h @ params["W3"] + params["b3"], 0.0)
    return jax.nn.sigmoid(h @ params["W4"] + params["b4"])


if __name__ == "__main__":
    nb_nodes = 32

    key = jax.random.PRNGKey(0)
    k_small, k_big, k_p = jax.random.split(key, 3)
    params = init_params(nb_nodes, k_p)

    # Small single-tile case, f32 everywhere (strict tolerance).
    x_small = jax.random.normal(k_small, (8, nb_nodes), dtype=jnp.float32)
    ref_small = deep_forward_ref(x_small, params)
    out_small = jax.block_until_ready(
        deep_forward(x_small, params, compute_dtype=jnp.float32))
    assert out_small.shape == (8, 1), out_small.shape
    assert jnp.allclose(out_small, ref_small, atol=1e-5, rtol=1e-5)

    # Multi-tile, ragged (partial tail block) batch, f32 path (strict).
    x_big = jax.random.normal(k_big, (300, nb_nodes), dtype=jnp.float32)
    ref_big = deep_forward_ref(x_big, params)
    out_big = jax.block_until_ready(
        deep_forward(x_big, params, compute_dtype=jnp.float32))
    assert out_big.shape == (300, 1), out_big.shape
    assert jnp.allclose(out_big, ref_big, atol=1e-5, rtol=1e-5)

    # Default bf16 MXU-operand + bf16 epilogue fast path (f32 accumulation,
    # f32 final layer / sigmoid) -> looser tolerance.
    out_bf16 = jax.block_until_ready(deep_forward(x_big, params))
    assert out_bf16.shape == (300, 1), out_bf16.shape
    assert jnp.allclose(out_bf16, ref_big, atol=3e-2, rtol=3e-2)

    print("KERNEL_OK")
</pallas_src>

<mosaic_0001>
module attributes {stable_mosaic.version = 11 : i64} {
  func.func @_deep_kernel(%arg0: i32, %arg1: memref<8x32xf32, #tpu.memory_space<vmem>>, %arg2: memref<32x256xf32, #tpu.memory_space<vmem>>, %arg3: memref<1x256xf32, #tpu.memory_space<vmem>>, %arg4: memref<256x128xf32, #tpu.memory_space<vmem>>, %arg5: memref<1x128xf32, #tpu.memory_space<vmem>>, %arg6: memref<128x64xf32, #tpu.memory_space<vmem>>, %arg7: memref<1x64xf32, #tpu.memory_space<vmem>>, %arg8: memref<8x64xf32, #tpu.memory_space<vmem>>, %arg9: memref<1x1xf32, #tpu.memory_space<vmem>>, %arg10: memref<1x8xf32, #tpu.memory_space<vmem>>) attributes {dimension_semantics = [#tpu.dimension_semantics<parallel>], iteration_bounds = array<i64: 1>, scalar_prefetch = 0 : i64, scratch_operands = 0 : i64, tpu.core_type = #tpu.core_type<tc>, window_params = [{transform_indices = @transform_0, window_bounds = array<i64: 8, 32>}, {pipeline_mode = #tpu.pipeline_mode<synchronous>, transform_indices = @transform_1, window_bounds = array<i64: 32, 256>}, {pipeline_mode = #tpu.pipeline_mode<synchronous>, transform_indices = @transform_2, window_bounds = array<i64: 1, 256>}, {pipeline_mode = #tpu.pipeline_mode<synchronous>, transform_indices = @transform_3, window_bounds = array<i64: 256, 128>}, {pipeline_mode = #tpu.pipeline_mode<synchronous>, transform_indices = @transform_4, window_bounds = array<i64: 1, 128>}, {pipeline_mode = #tpu.pipeline_mode<synchronous>, transform_indices = @transform_5, window_bounds = array<i64: 128, 64>}, {pipeline_mode = #tpu.pipeline_mode<synchronous>, transform_indices = @transform_6, window_bounds = array<i64: 1, 64>}, {pipeline_mode = #tpu.pipeline_mode<synchronous>, transform_indices = @transform_7, window_bounds = array<i64: 8, 64>}, {pipeline_mode = #tpu.pipeline_mode<synchronous>, transform_indices = @transform_8, window_bounds = array<i64: 1, 1>}, {transform_indices = @transform_9, window_bounds = array<i64: 1, 8>}]} {
    %c0 = arith.constant 0 : index
    %c0_0 = arith.constant 0 : index
    %0 = vector.load %arg1[%c0, %c0_0] : memref<8x32xf32, #tpu.memory_space<vmem>>, vector<8x32xf32>
    %c0_1 = arith.constant 0 : index
    %c0_2 = arith.constant 0 : index
    %1 = vector.load %arg2[%c0_1, %c0_2] : memref<32x256xf32, #tpu.memory_space<vmem>>, vector<32x256xf32>
    %cst = arith.constant dense<0.000000e+00> : vector<8x256xf32>
    %2 = tpu.matmul %0, %1, %cst {dimension_numbers = #tpu.dot_dimension_numbers<[1], [0], [0], [1], [0, 0, 1, 1], [], []>} : vector<8x32xf32>, vector<32x256xf32>, vector<8x256xf32> -> vector<8x256xf32>
    %c0_3 = arith.constant 0 : index
    %c0_4 = arith.constant 0 : index
    %3 = vector.load %arg3[%c0_3, %c0_4] : memref<1x256xf32, #tpu.memory_space<vmem>>, vector<1x256xf32>
    %4 = vector.broadcast %3 : vector<1x256xf32> to vector<8x256xf32>
    %5 = arith.addf %2, %4 : vector<8x256xf32>
    %cst_5 = arith.constant 0.000000e+00 : f32
    %6 = vector.broadcast %cst_5 : f32 to vector<8x256xf32>
    %7 = arith.maximumf %5, %6 : vector<8x256xf32>
    %c0_6 = arith.constant 0 : index
    %c0_7 = arith.constant 0 : index
    %8 = vector.load %arg4[%c0_6, %c0_7] : memref<256x128xf32, #tpu.memory_space<vmem>>, vector<256x128xf32>
    %cst_8 = arith.constant dense<0.000000e+00> : vector<8x128xf32>
    %9 = tpu.matmul %7, %8, %cst_8 {dimension_numbers = #tpu.dot_dimension_numbers<[1], [0], [0], [1], [0, 0, 1, 1], [], []>} : vector<8x256xf32>, vector<256x128xf32>, vector<8x128xf32> -> vector<8x128xf32>
    %c0_9 = arith.constant 0 : index
    %c0_10 = arith.constant 0 : index
    %10 = vector.load %arg5[%c0_9, %c0_10] : memref<1x128xf32, #tpu.memory_space<vmem>>, vector<1x128xf32>
    %11 = vector.broadcast %10 : vector<1x128xf32> to vector<8x128xf32>
    %12 = arith.addf %9, %11 : vector<8x128xf32>
    %cst_11 = arith.constant 0.000000e+00 : f32
    %13 = vector.broadcast %cst_11 : f32 to vector<8x128xf32>
    %14 = arith.maximumf %12, %13 : vector<8x128xf32>
    %c0_12 = arith.constant 0 : index
    %c0_13 = arith.constant 0 : index
    %15 = vector.load %arg6[%c0_12, %c0_13] : memref<128x64xf32, #tpu.memory_space<vmem>>, vector<128x64xf32>
    %cst_14 = arith.constant dense<0.000000e+00> : vector<8x64xf32>
    %16 = tpu.matmul %14, %15, %cst_14 {dimension_numbers = #tpu.dot_dimension_numbers<[1], [0], [0], [1], [0, 0, 1, 1], [], []>} : vector<8x128xf32>, vector<128x64xf32>, vector<8x64xf32> -> vector<8x64xf32>
    %c0_15 = arith.constant 0 : index
    %c0_16 = arith.constant 0 : index
    %17 = vector.load %arg7[%c0_15, %c0_16] : memref<1x64xf32, #tpu.memory_space<vmem>>, vector<1x64xf32>
    %18 = vector.broadcast %17 : vector<1x64xf32> to vector<8x64xf32>
    %19 = arith.addf %16, %18 : vector<8x64xf32>
    %cst_17 = arith.constant 0.000000e+00 : f32
    %20 = vector.broadcast %cst_17 : f32 to vector<8x64xf32>
    %21 = arith.maximumf %19, %20 : vector<8x64xf32>
    %c0_18 = arith.constant 0 : index
    %c0_19 = arith.constant 0 : index
    %22 = vector.load %arg8[%c0_18, %c0_19] : memref<8x64xf32, #tpu.memory_space<vmem>>, vector<8x64xf32>
    %cst_20 = arith.constant dense<0.000000e+00> : vector<8x8xf32>
    %23 = tpu.matmul %22, %21, %cst_20 {dimension_numbers = #tpu.dot_dimension_numbers<[1], [1], [0], [0], [0, 0, 1, 0], [], []>} : vector<8x64xf32>, vector<8x64xf32>, vector<8x8xf32> -> vector<8x8xf32>
    %cst_21 = arith.constant dense<0.000000e+00> : vector<8xf32>
    %24 = vector.multi_reduction <add>, %23, %cst_21 [0] : vector<8x8xf32> to vector<8xf32>
    %25 = vector.shape_cast %24 : vector<8xf32> to vector<1x8xf32>
    %c0_22 = arith.constant 0 : index
    %c0_23 = arith.constant 0 : index
    %26 = vector.load %arg9[%c0_22, %c0_23] : memref<1x1xf32, #tpu.memory_space<vmem>>, vector<1x1xf32>
    %27 = vector.broadcast %26 : vector<1x1xf32> to vector<1x8xf32>
    %28 = arith.addf %25, %27 : vector<1x8xf32>
    %29 = arith.negf %28 : vector<1x8xf32>
    %30 = math.exp %29 : vector<1x8xf32>
    %cst_24 = arith.constant 1.000000e+00 : f32
    %31 = vector.broadcast %cst_24 : f32 to vector<1x8xf32>
    %32 = arith.addf %31, %30 : vector<1x8xf32>
    %33 = arith.divf %31, %32 : vector<1x8xf32>
    %c0_25 = arith.constant 0 : index
    %c0_26 = arith.constant 0 : index
    %34 = vector.load %arg10[%c0_25, %c0_26] : memref<1x8xf32, #tpu.memory_space<vmem>>, vector<1x8xf32>
    tpu.vector_store %arg10[%c0_25, %c0_26], %33 {strides = array<i32>} : memref<1x8xf32, #tpu.memory_space<vmem>>, vector<1x8xf32>,
    return
  }
  func.func @transform_0(%arg0: i32) -> (i32, i32) {
    %c0_i32 = arith.constant 0 : i32
    %c0_i32_0 = arith.constant 0 : i32
    return %arg0, %c0_i32 : i32, i32
  }
  func.func @transform_1(%arg0: i32) -> (i32, i32) {
    %c0_i32 = arith.constant 0 : i32
    %c0_i32_0 = arith.constant 0 : i32
    %c0_i32_1 = arith.constant 0 : i32
    return %c0_i32, %c0_i32_0 : i32, i32
  }
  func.func @transform_2(%arg0: i32) -> (i32, i32) {
    %c0_i32 = arith.constant 0 : i32
    %c0_i32_0 = arith.constant 0 : i32
    %c0_i32_1 = arith.constant 0 : i32
    return %c0_i32, %c0_i32_0 : i32, i32
  }
  func.func @transform_3(%arg0: i32) -> (i32, i32) {
    %c0_i32 = arith.constant 0 : i32
    %c0_i32_0 = arith.constant 0 : i32
    %c0_i32_1 = arith.constant 0 : i32
    return %c0_i32, %c0_i32_0 : i32, i32
  }
  func.func @transform_4(%arg0: i32) -> (i32, i32) {
    %c0_i32 = arith.constant 0 : i32
    %c0_i32_0 = arith.constant 0 : i32
    %c0_i32_1 = arith.constant 0 : i32
    return %c0_i32, %c0_i32_0 : i32, i32
  }
  func.func @transform_5(%arg0: i32) -> (i32, i32) {
    %c0_i32 = arith.constant 0 : i32
    %c0_i32_0 = arith.constant 0 : i32
    %c0_i32_1 = arith.constant 0 : i32
    return %c0_i32, %c0_i32_0 : i32, i32
  }
  func.func @transform_6(%arg0: i32) -> (i32, i32) {
    %c0_i32 = arith.constant 0 : i32
    %c0_i32_0 = arith.constant 0 : i32
    %c0_i32_1 = arith.constant 0 : i32
    return %c0_i32, %c0_i32_0 : i32, i32
  }
  func.func @transform_7(%arg0: i32) -> (i32, i32) {
    %c0_i32 = arith.constant 0 : i32
    %c0_i32_0 = arith.constant 0 : i32
    %c0_i32_1 = arith.constant 0 : i32
    return %c0_i32, %c0_i32_0 : i32, i32
  }
  func.func @transform_8(%arg0: i32) -> (i32, i32) {
    %c0_i32 = arith.constant 0 : i32
    %c0_i32_0 = arith.constant 0 : i32
    %c0_i32_1 = arith.constant 0 : i32
    return %c0_i32, %c0_i32_0 : i32, i32
  }
  func.func @transform_9(%arg0: i32) -> (i32, i32) {
    %c0_i32 = arith.constant 0 : i32
    %c0_i32_0 = arith.constant 0 : i32
    return %c0_i32, %arg0 : i32, i32
  }
}

</mosaic_0001>

<llo_original>
// kernel: deep_forward.1
$region0: #{deep_forward.1}
  #allocation0 [shape = 'u32[]', space=smem, size = 0x4, offset = 0x4, fixed_abs, tag = 'smem constant byte address 0x4 - core index']
  #allocation1 [shape = 'u32[144,128]{1,0:T(1,128)}', space=vmem, size = 0x12000, scoped, tag = 'internal scratch']
  #allocation2 [shape = 'f32[1,1]{1,0:T(1,128)S(1)}', space=vmem, size = 0x200, scoped, tag = 'scoped memory for deep_forward.1']
  %s0 = inlined_call_operand.vmem [shape: f32[8,32], index: 0, kind: input, shape index: {}]
  %s1 = inlined_call_operand.vmem [shape: f32[32,256], index: 1, kind: input, shape index: {}]
  %s2 = inlined_call_operand.vmem [shape: f32[1,256], index: 2, kind: input, shape index: {}]
  %s3 = inlined_call_operand.hbm [shape: f32[256,128], index: 3, kind: input, shape index: {}]
  %s4 = inlined_call_operand.vmem [shape: f32[1,128], index: 4, kind: input, shape index: {}]
  %s5 = inlined_call_operand.vmem [shape: f32[128,64], index: 5, kind: input, shape index: {}]
  %s6 = inlined_call_operand.vmem [shape: f32[1,64], index: 6, kind: input, shape index: {}]
  %s7 = inlined_call_operand.vmem [shape: f32[8,64], index: 7, kind: input, shape index: {}]
  %s8 = inlined_call_operand.<no memory space> [shape: f32[1,1], index: 8, kind: input, shape index: {}]
  %s9 = inlined_call_operand.hbm [shape: f32[1,8], index: 9, kind: output, shape index: {}]
  %s10 = sld [smem:[#allocation0]]
  $region50: #{deep_forward.1} parent=0
    _
  %s12 = ssub.s32 1, %s10
  %s13 = scalar_select 0, %s12, %s10
  %v14 = vstv %s8
  %15 = vst [vmem:[#allocation2] sm:$0x1] %v14
  $region1: #{deep_forward.1} parent=0
    #allocation3 [shape = 'u8[131072]{0}', space=vmem, size = 0x20000, scoped, tag = 'input window, operand 3, single buffered']
    #allocation4 [shape = 's32[1]{0}', space=sflag, size = 0x4, scoped, tag = 'scoped memory for deep_forward.1']
    #allocation5 [shape = 's32[1]{0}', space=sflag, size = 0x4, scoped, tag = 'scoped memory for deep_forward.1']
    #allocation6 [shape = 'u8[512]{0}', space=vmem, size = 0x400, scoped, tag = 'output window, operand 0, single buffered']
    %16 = vsyncpa [#allocation4], 0
    %17 = vsyncpa [#allocation5], 0
    // Predicated region
    $region2: #{deep_forward.1} parent=1 // pred_check
      _
    $region3: #{deep_forward.1} parent=1 // pred_check_branch
      %19 = sbr.rel (0) target = $region5
    $region4: #{deep_forward.1} parent=1 // pred_region
      _
    $region5: #{deep_forward.1} parent=1 // pred_fallthru
      _
    // Predicated region
    $region6: #{deep_forward.1} parent=1 // pred_check
      _
    $region7: #{deep_forward.1} parent=1 // pred_check_branch
      %21 = sbr.rel (0) target = $region9
    $region8: #{deep_forward.1} parent=1 // pred_region
      _
    $region9: #{deep_forward.1} parent=1 // pred_fallthru
      _
    // Predicated region
    $region10: #{deep_forward.1} parent=1 // pred_check
      _
    $region11: #{deep_forward.1} parent=1 // pred_check_branch
      %23 = sbr.rel (0) target = $region13
    $region12: #{deep_forward.1} parent=1 // pred_region
      _
    $region13: #{deep_forward.1} parent=1 // pred_fallthru
      _
    // Predicated region
    $region14: #{deep_forward.1} parent=1 // pred_check
      _
    $region15: #{deep_forward.1} parent=1 // pred_check_branch
      %25 = sbr.rel (0) target = $region17
    $region16: #{deep_forward.1} parent=1 // pred_region
      %s27 = ssub.s32 4096, 4096
      %28 = vsyncadd [#allocation4], %s27
      %s29 = sshll.u32 [#allocation3], 4
      %s30 = int_to_ptr.vmem [resolvable:$true] %s29
      %35 = dma.hbm_to_vmem [thread:$0]  %s3, 4096, %s30, [#allocation4], 128, 128, 8
    $region17: #{deep_forward.1} parent=1 // pred_fallthru
      _
    // Predicated region
    $region18: #{deep_forward.1} parent=1 // pred_check
      _
    $region19: #{deep_forward.1} parent=1 // pred_check_branch
      %37 = sbr.rel (0) target = $region21
    $region20: #{deep_forward.1} parent=1 // pred_region
      _
    $region21: #{deep_forward.1} parent=1 // pred_fallthru
      _
    // Predicated region
    $region22: #{deep_forward.1} parent=1 // pred_check
      _
    $region23: #{deep_forward.1} parent=1 // pred_check_branch
      %39 = sbr.rel (0) target = $region25
    $region24: #{deep_forward.1} parent=1 // pred_region
      _
    $region25: #{deep_forward.1} parent=1 // pred_fallthru
      _
    // Predicated region
    $region26: #{deep_forward.1} parent=1 // pred_check
      _
    $region27: #{deep_forward.1} parent=1 // pred_check_branch
      %41 = sbr.rel (0) target = $region29
    $region28: #{deep_forward.1} parent=1 // pred_region
      _
    $region29: #{deep_forward.1} parent=1 // pred_fallthru
      _
    // Predicated region
    $region30: #{deep_forward.1} parent=1 // pred_check
      _
    $region31: #{deep_forward.1} parent=1 // pred_check_branch
      %43 = sbr.rel (0) target = $region33
    $region32: #{deep_forward.1} parent=1 // pred_region
      _
    $region33: #{deep_forward.1} parent=1 // pred_fallthru
      _
    // Predicated region
    $region34: #{deep_forward.1} parent=1 // pred_check
      _
    $region35: #{deep_forward.1} parent=1 // pred_check_branch
      %45 = sbr.rel (0) target = $region37
    $region36: #{deep_forward.1} parent=1 // pred_region
      _
    $region37: #{deep_forward.1} parent=1 // pred_fallthru
      _
    // Predicated region
    $region38: #{deep_forward.1} parent=1 // pred_check
      _
    $region39: #{deep_forward.1} parent=1 // pred_check_branch
      %47 = sbr.rel (0) target = $region41
    $region40: #{deep_forward.1} parent=1 // pred_region
      %48 = dma.done [#allocation4], 4096
    $region41: #{deep_forward.1} parent=1 // pred_fallthru
      _
    %v49 = vld [vmem:[%s0] sm:$0xff]
    %v50 = vld [vmem:[%s1] sm:$0xff]
    %v51 = vld [vmem:[%s1 + $0x8] sm:$0xff]
    %v52 = vld [vmem:[%s1 + $0x10] sm:$0xff]
    %v53 = vld [vmem:[%s1 + $0x18] sm:$0xff]
    %v54 = vld [vmem:[%s1 + $0x20] sm:$0xff]
    %v55 = vld [vmem:[%s1 + $0x28] sm:$0xff]
    %v56 = vld [vmem:[%s1 + $0x30] sm:$0xff]
    %v57 = vld [vmem:[%s1 + $0x38] sm:$0xff]
    %v58 = vld [vmem:[%s2] sm:$0x3]
    %v60 = vlaneseq
    %v61 = vshrl.u32 %v60, 7
    %v62 = vsub.s32 0, %v61
    %v63 = vrot.slane %v58, %v62
    %v64 = vlaneseq
    %v65 = vshrl.u32 %v64, 7
    %v66 = vsub.s32 1, %v65
    %v67 = vrot.slane %v58, %v66
    %vm70 = vcmask 261120
    %v72 = vsel %vm70, %v49, 0
    %74 = vmatprep.subr.mxu0 0.0
    %75 = vmatpush1.msra.mxu0 0.0
    %76 = vmatprep.subr.mxu0 0.0
    %77 = vmatpush1.msra.mxu0 0.0
    %78 = vmatprep.subr.mxu0 0.0
    %79 = vmatpush1.msra.mxu0 0.0
    %80 = vmatprep.subr.mxu0 0.0
    %81 = vmatpush1.msra.mxu0 0.0
    %82 = vmatprep.subr.mxu0 0.0
    %83 = vmatpush1.msra.mxu0 0.0
    %84 = vmatprep.subr.mxu0 0.0
    %85 = vmatpush1.msra.mxu0 0.0
    %86 = vmatprep.subr.mxu0 0.0
    %87 = vmatpush1.msra.mxu0 0.0
    %88 = vmatprep.subr.mxu0 0.0
    %89 = vmatpush1.msra.mxu0 0.0
    %90 = vmatprep.subr.mxu0 0.0
    %91 = vmatpush1.msra.mxu0 0.0
    %92 = vmatprep.subr.mxu0 0.0
    %93 = vmatpush1.msra.mxu0 0.0
    %94 = vmatprep.subr.mxu0 0.0
    %95 = vmatpush1.msra.mxu0 0.0
    %96 = vmatprep.subr.mxu0 0.0
    %97 = vmatpush1.msra.mxu0 0.0
    %98 = vmatprep.subr.mxu0 %v57
    %99 = vmatpush1.msra.mxu0 %v56
    %100 = vmatprep.subr.mxu0 %v55
    %101 = vmatpush1.msra.mxu0 %v54
    %102 = vmatprep.subr.mxu0 %v53
    %103 = vmatpush1.msra.mxu0 %v52
    %104 = vmatprep.subr.mxu0 %v51
    %105 = vmatpush1.msra.mxu0 %v50
    %106 = vmatprep.subr.mxu0 0.0
    %107 = vmatpush2.msra.mxu0 0.0
    %108 = vmatprep.subr.mxu0 0.0
    %109 = vmatpush2.msra.mxu0 0.0
    %110 = vmatprep.subr.mxu0 0.0
    %111 = vmatpush2.msra.mxu0 0.0
    %112 = vmatprep.subr.mxu0 0.0
    %113 = vmatpush2.msra.mxu0 0.0
    %114 = vmatprep.subr.mxu0 0.0
    %115 = vmatpush2.msra.mxu0 0.0
    %116 = vmatprep.subr.mxu0 0.0
    %117 = vmatpush2.msra.mxu0 0.0
    %118 = vmatprep.subr.mxu0 0.0
    %119 = vmatpush2.msra.mxu0 0.0
    %120 = vmatprep.subr.mxu0 0.0
    %121 = vmatpush2.msra.mxu0 0.0
    %122 = vmatprep.subr.mxu0 0.0
    %123 = vmatpush2.msra.mxu0 0.0
    %124 = vmatprep.subr.mxu0 0.0
    %125 = vmatpush2.msra.mxu0 0.0
    %126 = vmatprep.subr.mxu0 0.0
    %127 = vmatpush2.msra.mxu0 0.0
    %128 = vmatprep.subr.mxu0 0.0
    %129 = vmatpush2.msra.mxu0 0.0
    %130 = vmatprep.subr.mxu0 0.0
    %131 = vmatpush2.msra.mxu0 0.0
    %132 = vmatprep.subr.mxu0 0.0
    %133 = vmatpush2.msra.mxu0 0.0
    %134 = vmatprep.subr.mxu0 0.0
    %135 = vmatpush2.msra.mxu0 0.0
    %136 = vmatprep.subr.mxu0 0.0
    %137 = vmatpush2.msra.mxu0 0.0
    %138 = vmatprep.mubr.f32.mxu0 0.0
    %139 = vmatmul.mubr.f32.gmra.mxu0 %v72
    %v140 = vpop.f32.mrf.mxu0
    %v141 = vadd.f32 %v63, %v140
    %v142 = vpop.f32.mrf.mxu0
    %v143 = vadd.f32 %v67, %v142
    %144 = vdwg.mxu0
    %v145 = vmax.f32 %v141, 0.0
    %v146 = vmax.f32 %v143, 0.0
    %v147 = vld [vmem:[#allocation3] sm:$0xff]
    %v148 = vld [vmem:[#allocation3 + $0x8] sm:$0xff]
    %v149 = vld [vmem:[#allocation3 + $0x10] sm:$0xff]
    %v150 = vld [vmem:[#allocation3 + $0x18] sm:$0xff]
    %v151 = vld [vmem:[#allocation3 + $0x20] sm:$0xff]
    %v152 = vld [vmem:[#allocation3 + $0x28] sm:$0xff]
    %v153 = vld [vmem:[#allocation3 + $0x30] sm:$0xff]
    %v154 = vld [vmem:[#allocation3 + $0x38] sm:$0xff]
    %v155 = vld [vmem:[#allocation3 + $0x40] sm:$0xff]
    %v156 = vld [vmem:[#allocation3 + $0x48] sm:$0xff]
    %v157 = vld [vmem:[#allocation3 + $0x50] sm:$0xff]
    %v158 = vld [vmem:[#allocation3 + $0x58] sm:$0xff]
    %v159 = vld [vmem:[#allocation3 + $0x60] sm:$0xff]
    %v160 = vld [vmem:[#allocation3 + $0x68] sm:$0xff]
    %v161 = vld [vmem:[#allocation3 + $0x70] sm:$0xff]
    %v162 = vld [vmem:[#allocation3 + $0x78] sm:$0xff]
    %v163 = vld [vmem:[#allocation3 + $0x80] sm:$0xff]
    %v164 = vld [vmem:[#allocation3 + $0x88] sm:$0xff]
    %v165 = vld [vmem:[#allocation3 + $0x90] sm:$0xff]
    %v166 = vld [vmem:[#allocation3 + $0x98] sm:$0xff]
    %v167 = vld [vmem:[#allocation3 + $0xa0] sm:$0xff]
    %v168 = vld [vmem:[#allocation3 + $0xa8] sm:$0xff]
    %v169 = vld [vmem:[#allocation3 + $0xb0] sm:$0xff]
    %v170 = vld [vmem:[#allocation3 + $0xb8] sm:$0xff]
    %v171 = vld [vmem:[#allocation3 + $0xc0] sm:$0xff]
    %v172 = vld [vmem:[#allocation3 + $0xc8] sm:$0xff]
    %v173 = vld [vmem:[#allocation3 + $0xd0] sm:$0xff]
    %v174 = vld [vmem:[#allocation3 + $0xd8] sm:$0xff]
    %v175 = vld [vmem:[#allocation3 + $0xe0] sm:$0xff]
    %v176 = vld [vmem:[#allocation3 + $0xe8] sm:$0xff]
    %v177 = vld [vmem:[#allocation3 + $0xf0] sm:$0xff]
    %v178 = vld [vmem:[#allocation3 + $0xf8] sm:$0xff]
    %v179 = vld [vmem:[%s4] sm:$0x1]
    %v181 = vlaneseq
    %v182 = vshrl.u32 %v181, 7
    %v183 = vsub.s32 0, %v182
    %v184 = vrot.slane %v179, %v183
    %186 = vmatprep.subr.mxu0 0.0
    %187 = vmatpush1.msra.mxu0 %v162
    %188 = vmatprep.subr.mxu0 0.0
    %189 = vmatpush1.msra.mxu0 %v161
    %190 = vmatprep.subr.mxu0 0.0
    %191 = vmatpush1.msra.mxu0 %v160
    %192 = vmatprep.subr.mxu0 0.0
    %193 = vmatpush1.msra.mxu0 %v159
    %194 = vmatprep.subr.mxu0 0.0
    %195 = vmatpush1.msra.mxu0 %v158
    %196 = vmatprep.subr.mxu0 0.0
    %197 = vmatpush1.msra.mxu0 %v157
    %198 = vmatprep.subr.mxu0 0.0
    %199 = vmatpush1.msra.mxu0 %v156
    %200 = vmatprep.subr.mxu0 0.0
    %201 = vmatpush1.msra.mxu0 %v155
    %202 = vmatprep.subr.mxu0 0.0
    %203 = vmatpush1.msra.mxu0 %v154
    %204 = vmatprep.subr.mxu0 0.0
    %205 = vmatpush1.msra.mxu0 %v153
    %206 = vmatprep.subr.mxu0 0.0
    %207 = vmatpush1.msra.mxu0 %v152
    %208 = vmatprep.subr.mxu0 0.0
    %209 = vmatpush1.msra.mxu0 %v151
    %210 = vmatprep.subr.mxu0 0.0
    %211 = vmatpush1.msra.mxu0 %v150
    %212 = vmatprep.subr.mxu0 0.0
    %213 = vmatpush1.msra.mxu0 %v149
    %214 = vmatprep.subr.mxu0 0.0
    %215 = vmatpush1.msra.mxu0 %v148
    %216 = vmatprep.subr.mxu0 0.0
    %217 = vmatpush1.msra.mxu0 %v147
    %218 = vmatprep.subr.mxu0 0.0
    %219 = vmatpush2.msra.mxu0 %v178
    %220 = vmatprep.subr.mxu0 0.0
    %221 = vmatpush2.msra.mxu0 %v177
    %222 = vmatprep.subr.mxu0 0.0
    %223 = vmatpush2.msra.mxu0 %v176
    %224 = vmatprep.subr.mxu0 0.0
    %225 = vmatpush2.msra.mxu0 %v175
    %226 = vmatprep.subr.mxu0 0.0
    %227 = vmatpush2.msra.mxu0 %v174
    %228 = vmatprep.subr.mxu0 0.0
    %229 = vmatpush2.msra.mxu0 %v173
    %230 = vmatprep.subr.mxu0 0.0
    %231 = vmatpush2.msra.mxu0 %v172
    %232 = vmatprep.subr.mxu0 0.0
    %233 = vmatpush2.msra.mxu0 %v171
    %234 = vmatprep.subr.mxu0 0.0
    %235 = vmatpush2.msra.mxu0 %v170
    %236 = vmatprep.subr.mxu0 0.0
    %237 = vmatpush2.msra.mxu0 %v169
    %238 = vmatprep.subr.mxu0 0.0
    %239 = vmatpush2.msra.mxu0 %v168
    %240 = vmatprep.subr.mxu0 0.0
    %241 = vmatpush2.msra.mxu0 %v167
    %242 = vmatprep.subr.mxu0 0.0
    %243 = vmatpush2.msra.mxu0 %v166
    %244 = vmatprep.subr.mxu0 0.0
    %245 = vmatpush2.msra.mxu0 %v165
    %246 = vmatprep.subr.mxu0 0.0
    %247 = vmatpush2.msra.mxu0 %v164
    %248 = vmatprep.subr.mxu0 0.0
    %249 = vmatpush2.msra.mxu0 %v163
    %250 = vmatprep.mubr.f32.mxu0 %v146
    %251 = vmatmul.mubr.f32.gmra.mxu0 %v145
    %v252 = vpop.f32.mrf.mxu0
    %v253 = vadd.f32 %v184, %v252
    %v254 = vpop.f32.mrf.mxu0
    %255 = vdwg.mxu0
    %v256 = vmax.f32 %v253, 0.0
    %v257 = vld [vmem:[%s5] sm:$0xff]
    %v258 = vld [vmem:[%s5 + $0x8] sm:$0xff]
    %v259 = vld [vmem:[%s5 + $0x10] sm:$0xff]
    %v260 = vld [vmem:[%s5 + $0x18] sm:$0xff]
    %v261 = vld [vmem:[%s5 + $0x20] sm:$0xff]
    %v262 = vld [vmem:[%s5 + $0x28] sm:$0xff]
    %v263 = vld [vmem:[%s5 + $0x30] sm:$0xff]
    %v264 = vld [vmem:[%s5 + $0x38] sm:$0xff]
    %v265 = vld [vmem:[%s5 + $0x40] sm:$0xff]
    %v266 = vld [vmem:[%s5 + $0x48] sm:$0xff]
    %v267 = vld [vmem:[%s5 + $0x50] sm:$0xff]
    %v268 = vld [vmem:[%s5 + $0x58] sm:$0xff]
    %v269 = vld [vmem:[%s5 + $0x60] sm:$0xff]
    %v270 = vld [vmem:[%s5 + $0x68] sm:$0xff]
    %v271 = vld [vmem:[%s5 + $0x70] sm:$0xff]
    %v272 = vld [vmem:[%s5 + $0x78] sm:$0xff]
    %v273 = vld [vmem:[%s6] sm:$0x1]
    %v275 = vlaneseq
    %v276 = vshrl.u32 %v275, 7
    %v277 = vsub.s32 0, %v276
    %v278 = vrot.slane %v273, %v277
    %280 = vmatprep.subr.mxu0 0.0
    %281 = vmatpush1.msra.mxu0 %v272
    %282 = vmatprep.subr.mxu0 0.0
    %283 = vmatpush1.msra.mxu0 %v271
    %284 = vmatprep.subr.mxu0 0.0
    %285 = vmatpush1.msra.mxu0 %v270
    %286 = vmatprep.subr.mxu0 0.0
    %287 = vmatpush1.msra.mxu0 %v269
    %288 = vmatprep.subr.mxu0 0.0
    %289 = vmatpush1.msra.mxu0 %v268
    %290 = vmatprep.subr.mxu0 0.0
    %291 = vmatpush1.msra.mxu0 %v267
    %292 = vmatprep.subr.mxu0 0.0
    %293 = vmatpush1.msra.mxu0 %v266
    %294 = vmatprep.subr.mxu0 0.0
    %295 = vmatpush1.msra.mxu0 %v265
    %296 = vmatprep.subr.mxu0 0.0
    %297 = vmatpush1.msra.mxu0 %v264
    %298 = vmatprep.subr.mxu0 0.0
    %299 = vmatpush1.msra.mxu0 %v263
    %300 = vmatprep.subr.mxu0 0.0
    %301 = vmatpush1.msra.mxu0 %v262
    %302 = vmatprep.subr.mxu0 0.0
    %303 = vmatpush1.msra.mxu0 %v261
    %304 = vmatprep.subr.mxu0 0.0
    %305 = vmatpush1.msra.mxu0 %v260
    %306 = vmatprep.subr.mxu0 0.0
    %307 = vmatpush1.msra.mxu0 %v259
    %308 = vmatprep.subr.mxu0 0.0
    %309 = vmatpush1.msra.mxu0 %v258
    %310 = vmatprep.subr.mxu0 0.0
    %311 = vmatpush1.msra.mxu0 %v257
    %312 = vmatprep.subr.mxu0 0.0
    %313 = vmatpush2.msra.mxu0 0.0
    %314 = vmatprep.subr.mxu0 0.0
    %315 = vmatpush2.msra.mxu0 0.0
    %316 = vmatprep.subr.mxu0 0.0
    %317 = vmatpush2.msra.mxu0 0.0
    %318 = vmatprep.subr.mxu0 0.0
    %319 = vmatpush2.msra.mxu0 0.0
    %320 = vmatprep.subr.mxu0 0.0
    %321 = vmatpush2.msra.mxu0 0.0
    %322 = vmatprep.subr.mxu0 0.0
    %323 = vmatpush2.msra.mxu0 0.0
    %324 = vmatprep.subr.mxu0 0.0
    %325 = vmatpush2.msra.mxu0 0.0
    %326 = vmatprep.subr.mxu0 0.0
    %327 = vmatpush2.msra.mxu0 0.0
    %328 = vmatprep.subr.mxu0 0.0
    %329 = vmatpush2.msra.mxu0 0.0
    %330 = vmatprep.subr.mxu0 0.0
    %331 = vmatpush2.msra.mxu0 0.0
    %332 = vmatprep.subr.mxu0 0.0
    %333 = vmatpush2.msra.mxu0 0.0
    %334 = vmatprep.subr.mxu0 0.0
    %335 = vmatpush2.msra.mxu0 0.0
    %336 = vmatprep.subr.mxu0 0.0
    %337 = vmatpush2.msra.mxu0 0.0
    %338 = vmatprep.subr.mxu0 0.0
    %339 = vmatpush2.msra.mxu0 0.0
    %340 = vmatprep.subr.mxu0 0.0
    %341 = vmatpush2.msra.mxu0 0.0
    %342 = vmatprep.subr.mxu0 0.0
    %343 = vmatpush2.msra.mxu0 0.0
    %344 = vmatprep.mubr.f32.mxu0 0.0
    %345 = vmatmul.mubr.f32.gmra.mxu0 %v256
    %v346 = vpop.f32.mrf.mxu0
    %v347 = vadd.f32 %v278, %v346
    %v348 = vpop.f32.mrf.mxu0
    %349 = vdwg.mxu0
    %v350 = vmax.f32 %v347, 0.0
    %v351 = vld [vmem:[%s7] sm:$0xff]
    %vm352 = vcmask 523264
    %v354 = vsel %vm352, %v351, 0
    %v357 = vsel %vm352, %v350, 0
    %359 = vmatprep.subr.mxu0 0.0
    %360 = vmatpush1.xpose.msra.mxu0 0.0
    %361 = vmatprep.subr.mxu0 0.0
    %362 = vmatpush1.xpose.msra.mxu0 0.0
    %363 = vmatprep.subr.mxu0 0.0
    %364 = vmatpush1.xpose.msra.mxu0 0.0
    %365 = vmatprep.subr.mxu0 0.0
    %366 = vmatpush1.xpose.msra.mxu0 0.0
    %367 = vmatprep.subr.mxu0 0.0
    %368 = vmatpush1.xpose.msra.mxu0 0.0
    %369 = vmatprep.subr.mxu0 0.0
    %370 = vmatpush1.xpose.msra.mxu0 0.0
    %371 = vmatprep.subr.mxu0 0.0
    %372 = vmatpush1.xpose.msra.mxu0 0.0
    %373 = vmatprep.subr.mxu0 0.0
    %374 = vmatpush1.xpose.msra.mxu0 0.0
    %375 = vmatprep.subr.mxu0 0.0
    %376 = vmatpush1.xpose.msra.mxu0 0.0
    %377 = vmatprep.subr.mxu0 0.0
    %378 = vmatpush1.xpose.msra.mxu0 0.0
    %379 = vmatprep.subr.mxu0 0.0
    %380 = vmatpush1.xpose.msra.mxu0 0.0
    %381 = vmatprep.subr.mxu0 0.0
    %382 = vmatpush1.xpose.msra.mxu0 0.0
    %383 = vmatprep.subr.mxu0 0.0
    %384 = vmatpush1.xpose.msra.mxu0 0.0
    %385 = vmatprep.subr.mxu0 0.0
    %386 = vmatpush1.xpose.msra.mxu0 0.0
    %387 = vmatprep.subr.mxu0 0.0
    %388 = vmatpush1.xpose.msra.mxu0 0.0
    %389 = vmatprep.subr.mxu0 0.0
    %390 = vmatpush1.xpose.msra.mxu0 %v357
    %391 = vmatprep.subr.mxu0 0.0
    %392 = vmatpush2.xpose.msra.mxu0 0.0
    %393 = vmatprep.subr.mxu0 0.0
    %394 = vmatpush2.xpose.msra.mxu0 0.0
    %395 = vmatprep.subr.mxu0 0.0
    %396 = vmatpush2.xpose.msra.mxu0 0.0
    %397 = vmatprep.subr.mxu0 0.0
    %398 = vmatpush2.xpose.msra.mxu0 0.0
    %399 = vmatprep.subr.mxu0 0.0
    %400 = vmatpush2.xpose.msra.mxu0 0.0
    %401 = vmatprep.subr.mxu0 0.0
    %402 = vmatpush2.xpose.msra.mxu0 0.0
    %403 = vmatprep.subr.mxu0 0.0
    %404 = vmatpush2.xpose.msra.mxu0 0.0
    %405 = vmatprep.subr.mxu0 0.0
    %406 = vmatpush2.xpose.msra.mxu0 0.0
    %407 = vmatprep.subr.mxu0 0.0
    %408 = vmatpush2.xpose.msra.mxu0 0.0
    %409 = vmatprep.subr.mxu0 0.0
    %410 = vmatpush2.xpose.msra.mxu0 0.0
    %411 = vmatprep.subr.mxu0 0.0
    %412 = vmatpush2.xpose.msra.mxu0 0.0
    %413 = vmatprep.subr.mxu0 0.0
    %414 = vmatpush2.xpose.msra.mxu0 0.0
    %415 = vmatprep.subr.mxu0 0.0
    %416 = vmatpush2.xpose.msra.mxu0 0.0
    %417 = vmatprep.subr.mxu0 0.0
    %418 = vmatpush2.xpose.msra.mxu0 0.0
    %419 = vmatprep.subr.mxu0 0.0
    %420 = vmatpush2.xpose.msra.mxu0 0.0
    %421 = vmatprep.subr.mxu0 0.0
    %422 = vmatpush2.xpose.msra.mxu0 0.0
    %423 = vmatprep.mubr.f32.mxu0 0.0
    %424 = vmatmul.mubr.f32.gmra.mxu0 %v354
    %v425 = vpop.f32.mrf.mxu0
    %v426 = vadd.f32 0.0, %v425
    %v427 = vpop.f32.mrf.mxu0
    %428 = vdwg.mxu0
    %vm429 = vcmask 64512
    %v430 = vsel %vm429, %v426, 0.0
    %v431 = vrot.slane %v430, 4
    %v432 = vadd.f32 %v430, %v431
    %v433 = vrot.slane %v432, 2
    %v434 = vadd.f32 %v432, %v433
    %v435 = vrot.slane %v434, 1
    %v436 = vadd.f32 %v434, %v435
    %v437 = vld [vmem:[#allocation2] sm:$0x1]
    %439 = vset.pattern.permute.xlu0 0
    %440 = vperm.xlu0 %439, %v437
    %v441 = vpop.permute.xlu0 %440
    %v443 = vlaneseq
    %v444 = vshrl.u32 %v443, 7
    %v445 = vsub.s32 0, %v444
    %v446 = vrot.slane %v441, %v445
    %v447 = vadd.f32 %v436, %v446
    %v448 = vxor.u32 %v447, 2147483648
    %v449 = vmul.f32 %v448, 1.442695
    %v450 = vpow.pop %v449
    %v451 = vadd.f32 %v450, 1.0
    %v452 = vrcp.pop %v451
    %v453 = vmul.f32 1.0, %v452
    %vm454 = vcmask 57344
    %455 = vst.msk [vmem:[#allocation6] sm:$0x1] %vm454, %v453
    // Predicated region
    $region42: #{deep_forward.1} parent=1 // pred_check
      _
    $region43: #{deep_forward.1} parent=1 // pred_check_branch
      %457 = sbr.rel (0) target = $region45
    $region44: #{deep_forward.1} parent=1 // pred_region
      %s459 = ssub.s32 16, 16
      %460 = vsyncadd [#allocation5], %s459
      %s462 = sshll.u32 [#allocation6], 4
      %s463 = int_to_ptr.vmem [resolvable:$true] %s462
      %465 = dma.vmem_to_hbm [thread:$0]  %s463, 16, %s9, [#allocation5]
    $region45: #{deep_forward.1} parent=1 // pred_fallthru
      _
    // Predicated region
    $region46: #{deep_forward.1} parent=1 // pred_check
      _
    $region47: #{deep_forward.1} parent=1 // pred_check_branch
      %467 = sbr.rel (0) target = $region49
    $region48: #{deep_forward.1} parent=1 // pred_region
      %468 = dma.done [#allocation5], 16
    $region49: #{deep_forward.1} parent=1 // pred_fallthru
      _
    %469 = vsyncpa [#allocation4], 1
    %470 = vsyncpa [#allocation5], 1

</llo_original>
